<compile_context>
chip_gen: v7x
topology: tpu7x:2x2x1
jax: 0.10.0
libtpu: 0.0.40
codegen_flags: <defaults>
</compile_context>

<pallas_src>
import jax
import jax.numpy as jnp
from jax.experimental import pallas as pl
from jax.experimental.pallas import tpu as pltpu


def _round_up(x, m):
    return ((x + m - 1) // m) * m


def _vmem_capacity_bytes():
    """Physical VMEM of the local TPU; conservative (v7x) fallback if unknown."""
    try:
        cap = getattr(pltpu.get_tpu_info(), "vmem_capacity_bytes", None)
        if cap:
            return int(cap)
    except Exception:
        pass
    return 64 << 20


def _vmem_working_set(TM, TP, Hp, in_b, w_b, out_b, need_acc):
    """Estimated VMEM: double-buffered pipeline blocks (+ f32 accumulator)."""
    bufs = 2 * (TM * Hp * in_b       # x tile
                + Hp * TP * w_b      # fc1 weight panel
                + TP * Hp * w_b      # fc2 weight panel
                + TM * Hp * out_b)   # output tile
    bufs += 2 * (TP + Hp) * 4        # biases (negligible)
    return bufs + (TM * Hp * 4 if need_acc else 0)


_TM_CANDIDATES = (1024, 768, 512, 384, 256, 128, 64, 32, 16)
_TP_CANDIDATES = (512, 256, 128)


def _derive_tiles(T, Hp, P, in_b, w_b, out_b, need_acc, budget):
    """Largest token tile first (weight-stream amortisation is the priority),
    then the largest P panel, that fit the VMEM budget."""
    Tr = _round_up(T, 16)
    Pr = _round_up(P, 128)
    tp_probe = min(256, Pr)
    TM = 16
    for cand in _TM_CANDIDATES:
        tm = min(cand, Tr)
        if _vmem_working_set(tm, tp_probe, Hp, in_b, w_b, out_b, need_acc) <= budget:
            TM = tm
            break
    TP = min(128, Pr)
    for cand in _TP_CANDIDATES:
        tp = min(cand, Pr)
        if _vmem_working_set(TM, tp, Hp, in_b, w_b, out_b, need_acc) <= budget:
            TP = tp
            break
    return TM, TP


def _pad_to(a, shape):
    """Zero-pad `a` up to `shape`; no copy when already aligned."""
    if tuple(a.shape) == tuple(shape):
        return a
    return jnp.pad(a, [(0, s - d) for d, s in zip(a.shape, shape)])


def _ffn_kernel_acc(x_ref, w1_ref, b1_ref, w2_ref, b2_ref, o_ref, acc_ref):
    """bf16-output variant: f32 VMEM accumulator, cast at finalize.

    Blocks: x(TM,Hp) w1(Hp,TP) b1(1,TP) w2(TP,Hp) b2(1,Hp) o(TM,Hp) acc(TM,Hp)f32
    Grid = (token tiles, P panels); P (last axis) is the reduction axis.
    """
    p = pl.program_id(1)

    h = jnp.dot(x_ref[...], w1_ref[...], preferred_element_type=jnp.float32)
    h = jnp.maximum(h + b1_ref[...].astype(jnp.float32), 0.0)
    # TODO(synk): training-mode dropout (p>0) omitted; inference semantics.
    partial = jnp.dot(h.astype(w2_ref.dtype), w2_ref[...],
                      preferred_element_type=jnp.float32)

    @pl.when(p == 0)
    def _():
        acc_ref[...] = partial          # direct store: no zero-fill pass

    @pl.when(p > 0)
    def _():
        acc_ref[...] += partial

    @pl.when(p == pl.num_programs(1) - 1)
    def _():
        o_ref[...] = (acc_ref[...] + b2_ref[...].astype(jnp.float32)
                      ).astype(o_ref.dtype)


def _ffn_kernel_inplace(x_ref, w1_ref, b1_ref, w2_ref, b2_ref, o_ref):
    """f32-output variant: accumulate directly into the resident output block
    (no scratch accumulator, no finalize copy)."""
    p = pl.program_id(1)

    h = jnp.dot(x_ref[...], w1_ref[...], preferred_element_type=jnp.float32)
    h = jnp.maximum(h + b1_ref[...].astype(jnp.float32), 0.0)
    # TODO(synk): training-mode dropout (p>0) omitted; inference semantics.
    partial = jnp.dot(h.astype(w2_ref.dtype), w2_ref[...],
                      preferred_element_type=jnp.float32)

    @pl.when(p == 0)
    def _():
        o_ref[...] = partial

    @pl.when(p > 0)
    def _():
        o_ref[...] += partial

    @pl.when(p == pl.num_programs(1) - 1)
    def _():
        o_ref[...] += b2_ref[...].astype(jnp.float32)


def positionwise_feedforward(x, w1, b1, w2, b2, *, tm=None, tp=None,
                             compute_dtype=None):
    """y = fc2(relu(fc1(x))), dropout as identity.

    x: (B, S, H); w1: (H, P) [in, out]; b1: (P,); w2: (P, H); b2: (H,).
    compute_dtype: optional (e.g. jnp.bfloat16) cast of x/w1/w2 for MXU speed;
      accumulation / bias / ReLU stay in f32 (numerics-visible opt-in).
    NOTE: for production, pre-pad weights to the aligned shapes once at init;
    this wrapper skips the padding copy when shapes are already aligned.
    """
    B, S, H = x.shape
    P = w1.shape[1]
    T = B * S
    out_dtype = x.dtype

    if compute_dtype is not None:
        x = x.astype(compute_dtype)
        w1 = w1.astype(compute_dtype)
        w2 = w2.astype(compute_dtype)

    in_b = x.dtype.itemsize
    w_b = w1.dtype.itemsize
    out_b = out_dtype.itemsize
    need_acc = out_dtype != jnp.float32    # f32 out -> accumulate in o_ref

    # Lane/MXU alignment: 256 for the 2x256^2 MXUs (v6e/v7x); 128 for tiny H.
    lane_align = 256 if H >= 256 else 128
    Hp = _round_up(H, lane_align)

    cap = _vmem_capacity_bytes()
    TM, TP = _derive_tiles(T, Hp, P, in_b, w_b, out_b, need_acc,
                           budget=int(cap * 0.70))
    if tm is not None:
        TM = _round_up(min(tm, _round_up(T, 16)), 16)
    if tp is not None:
        TP = _round_up(min(tp, _round_up(P, 128)), 128)

    # Megacore (v7x): keep >=2 token tiles when there is enough work so the
    # "parallel" token axis can shard across both TensorCores.
    Tr = _round_up(T, 16)
    if Tr >= 512 and TM >= Tr:
        TM = _round_up((Tr + 1) // 2, 16)

    Tp = _round_up(T, TM)
    Pp = _round_up(P, TP)

    x2d = _pad_to(x.reshape(T, H), (Tp, Hp))
    w1p = _pad_to(w1, (Hp, Pp))
    b1p = _pad_to(b1.reshape(1, P), (1, Pp))
    w2p = _pad_to(w2, (Pp, Hp))
    b2p = _pad_to(b2.reshape(1, H), (1, Hp))

    grid = (Tp // TM, Pp // TP)

    est = _vmem_working_set(TM, TP, Hp, in_b, w_b, out_b, need_acc)
    vmem_limit = int(min(cap - (4 << 20), max(int(cap * 0.80), est + (8 << 20))))

    cost = pl.CostEstimate(
        flops=4 * Tp * Hp * Pp,                          # fc1 + fc2 matmuls
        bytes_accessed=(Tp * Hp * (in_b + out_b)
                        + grid[0] * 2 * Hp * Pp * w_b    # weights re-stream / token tile
                        + (Pp + Hp) * 4),
        transcendentals=0,
    )

    kernel = _ffn_kernel_acc if need_acc else _ffn_kernel_inplace
    scratch = [pltpu.VMEM((TM, Hp), jnp.float32)] if need_acc else []

    # TODO(synk): if xprof shows exposed weight DMA at large TM, move the w1/w2
    # BlockSpecs to pipeline_mode=pl.Buffered(3) (needs extra VMEM headroom).
    out2d = pl.pallas_call(
        kernel,
        out_shape=jax.ShapeDtypeStruct((Tp, Hp), out_dtype),
        grid_spec=pltpu.PrefetchScalarGridSpec(
            num_scalar_prefetch=0,
            grid=grid,
            in_specs=[
                pl.BlockSpec((TM, Hp), lambda i, p: (i, 0)),  # x tile (resident over P)
                pl.BlockSpec((Hp, TP), lambda i, p: (0, p)),  # fc1 weight panel
                pl.BlockSpec((1, TP), lambda i, p: (0, p)),   # fc1 bias panel
                pl.BlockSpec((TP, Hp), lambda i, p: (p, 0)),  # fc2 weight panel
                pl.BlockSpec((1, Hp), lambda i, p: (0, 0)),   # fc2 bias
            ],
            out_specs=pl.BlockSpec((TM, Hp), lambda i, p: (i, 0)),
            scratch_shapes=scratch,
        ),
        compiler_params=pltpu.CompilerParams(
            dimension_semantics=("parallel", "arbitrary"),
            vmem_limit_bytes=vmem_limit),
        cost_estimate=cost,
    )(x2d, w1p, b1p, w2p, b2p)

    return out2d[:T, :H].reshape(B, S, H)


def init_params(key, hid_dim, pf_dim, dtype=jnp.float32):
    """Deterministic init mimicking nn.Linear (uniform +-1/sqrt(fan_in)).
    Weights stored transposed relative to PyTorch: [in_dim, out_dim]."""
    k1, k2, k3, k4 = jax.random.split(key, 4)
    bound1 = 1.0 / (hid_dim ** 0.5)
    bound2 = 1.0 / (pf_dim ** 0.5)
    w1 = jax.random.uniform(k1, (hid_dim, pf_dim), dtype, -bound1, bound1)
    b1 = jax.random.uniform(k2, (pf_dim,), dtype, -bound1, bound1)
    w2 = jax.random.uniform(k3, (pf_dim, hid_dim), dtype, -bound2, bound2)
    b2 = jax.random.uniform(k4, (hid_dim,), dtype, -bound2, bound2)
    return w1, b1, w2, b2


if __name__ == "__main__":
    key = jax.random.PRNGKey(0)
    kx, kp = jax.random.split(key)

    batch, seq, hid_dim, pf_dim = 2, 8, 32, 64
    x = jax.random.normal(kx, (batch, seq, hid_dim), dtype=jnp.float32)
    w1, b1, w2, b2 = init_params(kp, hid_dim, pf_dim)

    # Pure-JAX reference.
    ref = (jnp.maximum(x.reshape(-1, hid_dim) @ w1 + b1, 0.0) @ w2 + b2)
    ref = ref.reshape(batch, seq, hid_dim)

    # f32 path (no scratch accumulator, tight tolerance).
    out = jax.block_until_ready(positionwise_feedforward(x, w1, b1, w2, b2))
    assert out.shape == (batch, seq, hid_dim)
    assert out.dtype == jnp.float32
    assert jnp.allclose(out, ref, atol=1e-5, rtol=1e-5)

    # bf16 weights/activations, f32 accumulation (scratch-accumulator path).
    out_bf16 = jax.block_until_ready(positionwise_feedforward(
        x.astype(jnp.bfloat16), w1.astype(jnp.bfloat16), b1.astype(jnp.bfloat16),
        w2.astype(jnp.bfloat16), b2.astype(jnp.bfloat16)))
    assert out_bf16.dtype == jnp.bfloat16
    assert jnp.allclose(out_bf16.astype(jnp.float32), ref, atol=0.1, rtol=0.1)

    # f32 model with opt-in bf16 MXU compute (mixed precision).
    out_mp = jax.block_until_ready(positionwise_feedforward(
        x, w1, b1, w2, b2, compute_dtype=jnp.bfloat16))
    assert out_mp.dtype == jnp.float32
    assert jnp.allclose(out_mp, ref, atol=0.1, rtol=0.1)

    print("KERNEL_OK")
</pallas_src>

<mosaic_0001>
module attributes {stable_mosaic.version = 11 : i64} {
  func.func @_ffn_kernel_inplace(%arg0: i32, %arg1: i32, %arg2: memref<16x128xf32, #tpu.memory_space<vmem>>, %arg3: memref<128x128xf32, #tpu.memory_space<vmem>>, %arg4: memref<1x128xf32, #tpu.memory_space<vmem>>, %arg5: memref<128x128xf32, #tpu.memory_space<vmem>>, %arg6: memref<1x128xf32, #tpu.memory_space<vmem>>, %arg7: memref<16x128xf32, #tpu.memory_space<vmem>>) attributes {dimension_semantics = [#tpu.dimension_semantics<parallel>, #tpu.dimension_semantics<arbitrary>], iteration_bounds = array<i64: 1, 1>, scalar_prefetch = 0 : i64, scratch_operands = 0 : i64, tpu.core_type = #tpu.core_type<tc>, window_params = [{transform_indices = @transform_0, window_bounds = array<i64: 16, 128>}, {transform_indices = @transform_1, window_bounds = array<i64: 128, 128>}, {transform_indices = @transform_2, window_bounds = array<i64: 1, 128>}, {transform_indices = @transform_3, window_bounds = array<i64: 128, 128>}, {pipeline_mode = #tpu.pipeline_mode<synchronous>, transform_indices = @transform_4, window_bounds = array<i64: 1, 128>}, {transform_indices = @transform_5, window_bounds = array<i64: 16, 128>}]} {
    %c0 = arith.constant 0 : index
    %c0_0 = arith.constant 0 : index
    %0 = vector.load %arg2[%c0, %c0_0] : memref<16x128xf32, #tpu.memory_space<vmem>>, vector<16x128xf32>
    %c0_1 = arith.constant 0 : index
    %c0_2 = arith.constant 0 : index
    %1 = vector.load %arg3[%c0_1, %c0_2] : memref<128x128xf32, #tpu.memory_space<vmem>>, vector<128x128xf32>
    %cst = arith.constant dense<0.000000e+00> : vector<16x128xf32>
    %2 = tpu.matmul %0, %1, %cst {dimension_numbers = #tpu.dot_dimension_numbers<[1], [0], [0], [1], [0, 0, 1, 1], [], []>} : vector<16x128xf32>, vector<128x128xf32>, vector<16x128xf32> -> vector<16x128xf32>
    %c0_3 = arith.constant 0 : index
    %c0_4 = arith.constant 0 : index
    %3 = vector.load %arg4[%c0_3, %c0_4] : memref<1x128xf32, #tpu.memory_space<vmem>>, vector<1x128xf32>
    %4 = vector.broadcast %3 : vector<1x128xf32> to vector<16x128xf32>
    %5 = arith.addf %2, %4 : vector<16x128xf32>
    %cst_5 = arith.constant 0.000000e+00 : f32
    %6 = vector.broadcast %cst_5 : f32 to vector<16x128xf32>
    %7 = arith.maximumf %5, %6 : vector<16x128xf32>
    %c0_6 = arith.constant 0 : index
    %c0_7 = arith.constant 0 : index
    %8 = vector.load %arg5[%c0_6, %c0_7] : memref<128x128xf32, #tpu.memory_space<vmem>>, vector<128x128xf32>
    %cst_8 = arith.constant dense<0.000000e+00> : vector<16x128xf32>
    %9 = tpu.matmul %7, %8, %cst_8 {dimension_numbers = #tpu.dot_dimension_numbers<[1], [0], [0], [1], [0, 0, 1, 1], [], []>} : vector<16x128xf32>, vector<128x128xf32>, vector<16x128xf32> -> vector<16x128xf32>
    %c0_i32 = arith.constant 0 : i32
    %10 = arith.cmpi eq, %arg1, %c0_i32 : i32
    %11 = arith.extui %10 : i1 to i32
    %c0_i32_9 = arith.constant 0 : i32
    %12 = arith.cmpi ne, %11, %c0_i32_9 : i32
    scf.if %12 {
      %c0_14 = arith.constant 0 : index
      %c0_15 = arith.constant 0 : index
      %19 = vector.load %arg7[%c0_14, %c0_15] : memref<16x128xf32, #tpu.memory_space<vmem>>, vector<16x128xf32>
      tpu.vector_store %arg7[%c0_14, %c0_15], %9 {strides = array<i32>} : memref<16x128xf32, #tpu.memory_space<vmem>>, vector<16x128xf32>,
    } else {
    }
    %c0_i32_10 = arith.constant 0 : i32
    %13 = arith.cmpi sgt, %arg1, %c0_i32_10 : i32
    %14 = arith.extui %13 : i1 to i32
    %c0_i32_11 = arith.constant 0 : i32
    %15 = arith.cmpi ne, %14, %c0_i32_11 : i32
    scf.if %15 {
      %c0_14 = arith.constant 0 : index
      %c0_15 = arith.constant 0 : index
      %19 = vector.load %arg7[%c0_14, %c0_15] : memref<16x128xf32, #tpu.memory_space<vmem>>, vector<16x128xf32>
      %20 = arith.addf %19, %9 : vector<16x128xf32>
      %c0_16 = arith.constant 0 : index
      %c0_17 = arith.constant 0 : index
      %21 = vector.load %arg7[%c0_16, %c0_17] : memref<16x128xf32, #tpu.memory_space<vmem>>, vector<16x128xf32>
      tpu.vector_store %arg7[%c0_16, %c0_17], %20 {strides = array<i32>} : memref<16x128xf32, #tpu.memory_space<vmem>>, vector<16x128xf32>,
    } else {
    }
    %c0_i32_12 = arith.constant 0 : i32
    %16 = arith.cmpi eq, %arg1, %c0_i32_12 : i32
    %17 = arith.extui %16 : i1 to i32
    %c0_i32_13 = arith.constant 0 : i32
    %18 = arith.cmpi ne, %17, %c0_i32_13 : i32
    scf.if %18 {
      %c0_14 = arith.constant 0 : index
      %c0_15 = arith.constant 0 : index
      %19 = vector.load %arg7[%c0_14, %c0_15] : memref<16x128xf32, #tpu.memory_space<vmem>>, vector<16x128xf32>
      %c0_16 = arith.constant 0 : index
      %c0_17 = arith.constant 0 : index
      %20 = vector.load %arg6[%c0_16, %c0_17] : memref<1x128xf32, #tpu.memory_space<vmem>>, vector<1x128xf32>
      %21 = vector.broadcast %20 : vector<1x128xf32> to vector<16x128xf32>
      %22 = arith.addf %19, %21 : vector<16x128xf32>
      %c0_18 = arith.constant 0 : index
      %c0_19 = arith.constant 0 : index
      %23 = vector.load %arg7[%c0_18, %c0_19] : memref<16x128xf32, #tpu.memory_space<vmem>>, vector<16x128xf32>
      tpu.vector_store %arg7[%c0_18, %c0_19], %22 {strides = array<i32>} : memref<16x128xf32, #tpu.memory_space<vmem>>, vector<16x128xf32>,
    } else {
    }
    return
  }
  func.func @transform_0(%arg0: i32, %arg1: i32) -> (i32, i32) {
    %c0_i32 = arith.constant 0 : i32
    %c0_i32_0 = arith.constant 0 : i32
    return %arg0, %c0_i32 : i32, i32
  }
  func.func @transform_1(%arg0: i32, %arg1: i32) -> (i32, i32) {
    %c0_i32 = arith.constant 0 : i32
    %c0_i32_0 = arith.constant 0 : i32
    return %c0_i32, %arg1 : i32, i32
  }
  func.func @transform_2(%arg0: i32, %arg1: i32) -> (i32, i32) {
    %c0_i32 = arith.constant 0 : i32
    %c0_i32_0 = arith.constant 0 : i32
    return %c0_i32, %arg1 : i32, i32
  }
  func.func @transform_3(%arg0: i32, %arg1: i32) -> (i32, i32) {
    %c0_i32 = arith.constant 0 : i32
    %c0_i32_0 = arith.constant 0 : i32
    return %arg1, %c0_i32 : i32, i32
  }
  func.func @transform_4(%arg0: i32, %arg1: i32) -> (i32, i32) {
    %c0_i32 = arith.constant 0 : i32
    %c0_i32_0 = arith.constant 0 : i32
    %c0_i32_1 = arith.constant 0 : i32
    return %c0_i32, %c0_i32_0 : i32, i32
  }
  func.func @transform_5(%arg0: i32, %arg1: i32) -> (i32, i32) {
    %c0_i32 = arith.constant 0 : i32
    %c0_i32_0 = arith.constant 0 : i32
    return %arg0, %c0_i32 : i32, i32
  }
}

</mosaic_0001>

<llo_original>
// kernel: tpu_custom_call.1
$region0: #{tpu_custom_call.1}
  #allocation0 [shape = 'u32[]', space=smem, size = 0x4, offset = 0x4, fixed_abs, tag = 'smem constant byte address 0x4 - core index']
  #allocation1 [shape = 'u32[144,128]{1,0:T(1,128)}', space=vmem, size = 0x12000, scoped, tag = 'internal scratch']
  %s0 = inlined_call_operand.hbm [shape: f32[16,128], index: 0, kind: input, shape index: {}]
  %s1 = inlined_call_operand.hbm [shape: f32[128,128], index: 1, kind: input, shape index: {}]
  %s2 = inlined_call_operand.vmem [shape: f32[1,128], index: 2, kind: input, shape index: {}]
  %s3 = inlined_call_operand.hbm [shape: f32[128,128], index: 3, kind: input, shape index: {}]
  %s4 = inlined_call_operand.vmem [shape: f32[1,128], index: 4, kind: input, shape index: {}]
  %s5 = inlined_call_operand.hbm [shape: f32[16,128], index: 5, kind: output, shape index: {}]
  %s6 = sld [smem:[#allocation0]]
  $region54: #{tpu_custom_call.1} parent=0
    _
  %s8 = ssub.s32 1, %s6
  %s9 = scalar_select 0, %s8, %s6
  $region1: #{tpu_custom_call.1} parent=0
    #allocation2 [shape = 'u8[8192]{0}', space=vmem, size = 0x2000, scoped, tag = 'input window, operand 0, single buffered']
    #allocation3 [shape = 's32[1]{0}', space=sflag, size = 0x4, scoped, tag = 'scoped memory for tpu_custom_call.1']
    #allocation4 [shape = 's32[1]{0}', space=sflag, size = 0x4, scoped, tag = 'scoped memory for tpu_custom_call.1']
    #allocation5 [shape = 'u8[65536]{0}', space=vmem, size = 0x10000, scoped, tag = 'input window, operand 1, single buffered']
    #allocation6 [shape = 's32[1]{0}', space=sflag, size = 0x4, scoped, tag = 'scoped memory for tpu_custom_call.1']
    #allocation7 [shape = 'u8[65536]{0}', space=vmem, size = 0x10000, scoped, tag = 'input window, operand 3, single buffered']
    #allocation8 [shape = 'u8[8192]{0}', space=vmem, size = 0x2000, scoped, tag = 'output window, operand 0, single buffered']
    %10 = vsyncpa [#allocation3], 0
    %11 = vsyncpa [#allocation6], 0
    %12 = vsyncpa [#allocation4], 0
    // Predicated region
    $region2: #{tpu_custom_call.1} parent=1 // pred_check
      _
    $region3: #{tpu_custom_call.1} parent=1 // pred_check_branch
      %14 = sbr.rel (0) target = $region5
    $region4: #{tpu_custom_call.1} parent=1 // pred_region
      %s16 = ssub.s32 256, 256
      %17 = vsyncadd [#allocation3], %s16
      %s18 = sshll.u32 [#allocation2], 4
      %s19 = int_to_ptr.vmem [resolvable:$true] %s18
      %24 = dma.hbm_to_vmem [thread:$0]  %s0, 256, %s19, [#allocation3], 128, 128, 8
    $region5: #{tpu_custom_call.1} parent=1 // pred_fallthru
      _
    // Predicated region
    $region6: #{tpu_custom_call.1} parent=1 // pred_check
      _
    $region7: #{tpu_custom_call.1} parent=1 // pred_check_branch
      %26 = sbr.rel (0) target = $region9
    $region8: #{tpu_custom_call.1} parent=1 // pred_region
      %s28 = ssub.s32 2048, 2048
      %29 = vsyncadd [#allocation6], %s28
      %s30 = sshll.u32 [#allocation5], 4
      %s31 = int_to_ptr.vmem [resolvable:$true] %s30
      %36 = dma.hbm_to_vmem [thread:$0]  %s1, 2048, %s31, [#allocation6], 128, 128, 8
    $region9: #{tpu_custom_call.1} parent=1 // pred_fallthru
      _
    // Predicated region
    $region10: #{tpu_custom_call.1} parent=1 // pred_check
      _
    $region11: #{tpu_custom_call.1} parent=1 // pred_check_branch
      %38 = sbr.rel (0) target = $region13
    $region12: #{tpu_custom_call.1} parent=1 // pred_region
      _
    $region13: #{tpu_custom_call.1} parent=1 // pred_fallthru
      _
    // Predicated region
    $region14: #{tpu_custom_call.1} parent=1 // pred_check
      _
    $region15: #{tpu_custom_call.1} parent=1 // pred_check_branch
      %40 = sbr.rel (0) target = $region17
    $region16: #{tpu_custom_call.1} parent=1 // pred_region
      %s42 = ssub.s32 2048, 2048
      %43 = vsyncadd [#allocation6], %s42
      %s44 = sshll.u32 [#allocation7], 4
      %s45 = int_to_ptr.vmem [resolvable:$true] %s44
      %50 = dma.hbm_to_vmem [thread:$0]  %s3, 2048, %s45, [#allocation6], 128, 128, 8
    $region17: #{tpu_custom_call.1} parent=1 // pred_fallthru
      _
    // Predicated region
    $region18: #{tpu_custom_call.1} parent=1 // pred_check
      _
    $region19: #{tpu_custom_call.1} parent=1 // pred_check_branch
      %52 = sbr.rel (0) target = $region21
    $region20: #{tpu_custom_call.1} parent=1 // pred_region
      _
    $region21: #{tpu_custom_call.1} parent=1 // pred_fallthru
      _
    // Predicated region
    $region22: #{tpu_custom_call.1} parent=1 // pred_check
      _
    $region23: #{tpu_custom_call.1} parent=1 // pred_check_branch
      %54 = sbr.rel (0) target = $region25
    $region24: #{tpu_custom_call.1} parent=1 // pred_region
      %55 = dma.done [#allocation3], 256
    $region25: #{tpu_custom_call.1} parent=1 // pred_fallthru
      _
    // Predicated region
    $region26: #{tpu_custom_call.1} parent=1 // pred_check
      _
    $region27: #{tpu_custom_call.1} parent=1 // pred_check_branch
      %57 = sbr.rel (0) target = $region29
    $region28: #{tpu_custom_call.1} parent=1 // pred_region
      %58 = dma.done [#allocation6], 2048
    $region29: #{tpu_custom_call.1} parent=1 // pred_fallthru
      _
    // Predicated region
    $region30: #{tpu_custom_call.1} parent=1 // pred_check
      _
    $region31: #{tpu_custom_call.1} parent=1 // pred_check_branch
      %60 = sbr.rel (0) target = $region33
    $region32: #{tpu_custom_call.1} parent=1 // pred_region
      %61 = dma.done [#allocation6], 2048
    $region33: #{tpu_custom_call.1} parent=1 // pred_fallthru
      _
    %v62 = vld [vmem:[#allocation2] sm:$0xff]
    %v63 = vld [vmem:[#allocation2 + $0x8] sm:$0xff]
    %v64 = vld [vmem:[#allocation5] sm:$0xff]
    %v65 = vld [vmem:[#allocation5 + $0x8] sm:$0xff]
    %v66 = vld [vmem:[#allocation5 + $0x10] sm:$0xff]
    %v67 = vld [vmem:[#allocation5 + $0x18] sm:$0xff]
    %v68 = vld [vmem:[#allocation5 + $0x20] sm:$0xff]
    %v69 = vld [vmem:[#allocation5 + $0x28] sm:$0xff]
    %v70 = vld [vmem:[#allocation5 + $0x30] sm:$0xff]
    %v71 = vld [vmem:[#allocation5 + $0x38] sm:$0xff]
    %v72 = vld [vmem:[#allocation5 + $0x40] sm:$0xff]
    %v73 = vld [vmem:[#allocation5 + $0x48] sm:$0xff]
    %v74 = vld [vmem:[#allocation5 + $0x50] sm:$0xff]
    %v75 = vld [vmem:[#allocation5 + $0x58] sm:$0xff]
    %v76 = vld [vmem:[#allocation5 + $0x60] sm:$0xff]
    %v77 = vld [vmem:[#allocation5 + $0x68] sm:$0xff]
    %v78 = vld [vmem:[#allocation5 + $0x70] sm:$0xff]
    %v79 = vld [vmem:[#allocation5 + $0x78] sm:$0xff]
    %v80 = vld [vmem:[%s2] sm:$0x1]
    %v82 = vlaneseq
    %v83 = vshrl.u32 %v82, 7
    %v84 = vsub.s32 0, %v83
    %v85 = vrot.slane %v80, %v84
    %87 = vmatprep.subr.mxu0 0.0
    %88 = vmatpush1.msra.mxu0 %v64
    %89 = vmatprep.subr.mxu0 0.0
    %90 = vmatpush1.msra.mxu0 %v65
    %91 = vmatprep.subr.mxu0 0.0
    %92 = vmatpush1.msra.mxu0 %v66
    %93 = vmatprep.subr.mxu0 0.0
    %94 = vmatpush1.msra.mxu0 %v67
    %95 = vmatprep.subr.mxu0 0.0
    %96 = vmatpush1.msra.mxu0 %v68
    %97 = vmatprep.subr.mxu0 0.0
    %98 = vmatpush1.msra.mxu0 %v69
    %99 = vmatprep.subr.mxu0 0.0
    %100 = vmatpush1.msra.mxu0 %v70
    %101 = vmatprep.subr.mxu0 0.0
    %102 = vmatpush1.msra.mxu0 %v71
    %103 = vmatprep.subr.mxu0 0.0
    %104 = vmatpush1.msra.mxu0 %v72
    %105 = vmatprep.subr.mxu0 0.0
    %106 = vmatpush1.msra.mxu0 %v73
    %107 = vmatprep.subr.mxu0 0.0
    %108 = vmatpush1.msra.mxu0 %v74
    %109 = vmatprep.subr.mxu0 0.0
    %110 = vmatpush1.msra.mxu0 %v75
    %111 = vmatprep.subr.mxu0 0.0
    %112 = vmatpush1.msra.mxu0 %v76
    %113 = vmatprep.subr.mxu0 0.0
    %114 = vmatpush1.msra.mxu0 %v77
    %115 = vmatprep.subr.mxu0 0.0
    %116 = vmatpush1.msra.mxu0 %v78
    %117 = vmatprep.subr.mxu0 0.0
    %118 = vmatpush1.msra.mxu0 %v79
    %119 = vmatprep.subr.mxu0 0.0
    %120 = vmatpush1.msra.mxu0 0.0
    %121 = vmatprep.subr.mxu0 0.0
    %122 = vmatpush1.msra.mxu0 0.0
    %123 = vmatprep.subr.mxu0 0.0
    %124 = vmatpush1.msra.mxu0 0.0
    %125 = vmatprep.subr.mxu0 0.0
    %126 = vmatpush1.msra.mxu0 0.0
    %127 = vmatprep.subr.mxu0 0.0
    %128 = vmatpush1.msra.mxu0 0.0
    %129 = vmatprep.subr.mxu0 0.0
    %130 = vmatpush1.msra.mxu0 0.0
    %131 = vmatprep.subr.mxu0 0.0
    %132 = vmatpush1.msra.mxu0 0.0
    %133 = vmatprep.subr.mxu0 0.0
    %134 = vmatpush1.msra.mxu0 0.0
    %135 = vmatprep.subr.mxu0 0.0
    %136 = vmatpush1.msra.mxu0 0.0
    %137 = vmatprep.subr.mxu0 0.0
    %138 = vmatpush1.msra.mxu0 0.0
    %139 = vmatprep.subr.mxu0 0.0
    %140 = vmatpush1.msra.mxu0 0.0
    %141 = vmatprep.subr.mxu0 0.0
    %142 = vmatpush1.msra.mxu0 0.0
    %143 = vmatprep.subr.mxu0 0.0
    %144 = vmatpush1.msra.mxu0 0.0
    %145 = vmatprep.subr.mxu0 0.0
    %146 = vmatpush1.msra.mxu0 0.0
    %147 = vmatprep.subr.mxu0 0.0
    %148 = vmatpush1.msra.mxu0 0.0
    %149 = vmatprep.subr.mxu0 0.0
    %150 = vmatpush1.msra.mxu0 0.0
    %151 = vmatprep.mubr.f32.mxu0 0.0
    %152 = vmatmul.mubr.f32.gmra.mrb[0].mxu0 %v62
    %v153 = vpop.f32.mrb[0].mxu0
    %v154 = vadd.f32 %v85, %v153
    %v155 = vpop.f32.mrb[0].mxu0
    %156 = vmatprep.mubr.f32.mxu0 0.0
    %157 = vmatmul.mubr.f32.gmra.mrb[0].mxu0 %v63
    %v158 = vpop.f32.mrb[0].mxu0
    %v159 = vadd.f32 %v85, %v158
    %v160 = vpop.f32.mrb[0].mxu0
    %161 = vdwg.mxu0
    %v162 = vmax.f32 %v154, 0.0
    %v163 = vmax.f32 %v159, 0.0
    %v164 = vld [vmem:[#allocation7] sm:$0xff]
    %v165 = vld [vmem:[#allocation7 + $0x8] sm:$0xff]
    %v166 = vld [vmem:[#allocation7 + $0x10] sm:$0xff]
    %v167 = vld [vmem:[#allocation7 + $0x18] sm:$0xff]
    %v168 = vld [vmem:[#allocation7 + $0x20] sm:$0xff]
    %v169 = vld [vmem:[#allocation7 + $0x28] sm:$0xff]
    %v170 = vld [vmem:[#allocation7 + $0x30] sm:$0xff]
    %v171 = vld [vmem:[#allocation7 + $0x38] sm:$0xff]
    %v172 = vld [vmem:[#allocation7 + $0x40] sm:$0xff]
    %v173 = vld [vmem:[#allocation7 + $0x48] sm:$0xff]
    %v174 = vld [vmem:[#allocation7 + $0x50] sm:$0xff]
    %v175 = vld [vmem:[#allocation7 + $0x58] sm:$0xff]
    %v176 = vld [vmem:[#allocation7 + $0x60] sm:$0xff]
    %v177 = vld [vmem:[#allocation7 + $0x68] sm:$0xff]
    %v178 = vld [vmem:[#allocation7 + $0x70] sm:$0xff]
    %v179 = vld [vmem:[#allocation7 + $0x78] sm:$0xff]
    %180 = vmatprep.subr.mxu0 0.0
    %181 = vmatpush1.msra.mxu0 %v164
    %182 = vmatprep.subr.mxu0 0.0
    %183 = vmatpush1.msra.mxu0 %v165
    %184 = vmatprep.subr.mxu0 0.0
    %185 = vmatpush1.msra.mxu0 %v166
    %186 = vmatprep.subr.mxu0 0.0
    %187 = vmatpush1.msra.mxu0 %v167
    %188 = vmatprep.subr.mxu0 0.0
    %189 = vmatpush1.msra.mxu0 %v168
    %190 = vmatprep.subr.mxu0 0.0
    %191 = vmatpush1.msra.mxu0 %v169
    %192 = vmatprep.subr.mxu0 0.0
    %193 = vmatpush1.msra.mxu0 %v170
    %194 = vmatprep.subr.mxu0 0.0
    %195 = vmatpush1.msra.mxu0 %v171
    %196 = vmatprep.subr.mxu0 0.0
    %197 = vmatpush1.msra.mxu0 %v172
    %198 = vmatprep.subr.mxu0 0.0
    %199 = vmatpush1.msra.mxu0 %v173
    %200 = vmatprep.subr.mxu0 0.0
    %201 = vmatpush1.msra.mxu0 %v174
    %202 = vmatprep.subr.mxu0 0.0
    %203 = vmatpush1.msra.mxu0 %v175
    %204 = vmatprep.subr.mxu0 0.0
    %205 = vmatpush1.msra.mxu0 %v176
    %206 = vmatprep.subr.mxu0 0.0
    %207 = vmatpush1.msra.mxu0 %v177
    %208 = vmatprep.subr.mxu0 0.0
    %209 = vmatpush1.msra.mxu0 %v178
    %210 = vmatprep.subr.mxu0 0.0
    %211 = vmatpush1.msra.mxu0 %v179
    %212 = vmatprep.subr.mxu0 0.0
    %213 = vmatpush1.msra.mxu0 0.0
    %214 = vmatprep.subr.mxu0 0.0
    %215 = vmatpush1.msra.mxu0 0.0
    %216 = vmatprep.subr.mxu0 0.0
    %217 = vmatpush1.msra.mxu0 0.0
    %218 = vmatprep.subr.mxu0 0.0
    %219 = vmatpush1.msra.mxu0 0.0
    %220 = vmatprep.subr.mxu0 0.0
    %221 = vmatpush1.msra.mxu0 0.0
    %222 = vmatprep.subr.mxu0 0.0
    %223 = vmatpush1.msra.mxu0 0.0
    %224 = vmatprep.subr.mxu0 0.0
    %225 = vmatpush1.msra.mxu0 0.0
    %226 = vmatprep.subr.mxu0 0.0
    %227 = vmatpush1.msra.mxu0 0.0
    %228 = vmatprep.subr.mxu0 0.0
    %229 = vmatpush1.msra.mxu0 0.0
    %230 = vmatprep.subr.mxu0 0.0
    %231 = vmatpush1.msra.mxu0 0.0
    %232 = vmatprep.subr.mxu0 0.0
    %233 = vmatpush1.msra.mxu0 0.0
    %234 = vmatprep.subr.mxu0 0.0
    %235 = vmatpush1.msra.mxu0 0.0
    %236 = vmatprep.subr.mxu0 0.0
    %237 = vmatpush1.msra.mxu0 0.0
    %238 = vmatprep.subr.mxu0 0.0
    %239 = vmatpush1.msra.mxu0 0.0
    %240 = vmatprep.subr.mxu0 0.0
    %241 = vmatpush1.msra.mxu0 0.0
    %242 = vmatprep.subr.mxu0 0.0
    %243 = vmatpush1.msra.mxu0 0.0
    %244 = vmatprep.mubr.f32.mxu0 0.0
    %245 = vmatmul.mubr.f32.gmra.mrb[0].mxu0 %v162
    %v246 = vpop.f32.mrb[0].mxu0
    %v247 = vadd.f32 0.0, %v246
    %v248 = vpop.f32.mrb[0].mxu0
    %249 = vmatprep.mubr.f32.mxu0 0.0
    %250 = vmatmul.mubr.f32.gmra.mrb[0].mxu0 %v163
    %v251 = vpop.f32.mrb[0].mxu0
    %v252 = vadd.f32 0.0, %v251
    %v253 = vpop.f32.mrb[0].mxu0
    %254 = vdwg.mxu0
    %p255 = scmp.eq.s32.totalorder 0, 0
    // Predicated region
    $region34: #{tpu_custom_call.1} parent=1 // pred_check
      %p256 = pneg %p255
    $region35: #{tpu_custom_call.1} parent=1 // pred_check_branch
      %258 = sbr.rel (%p256) target = $region37
    $region36: #{tpu_custom_call.1} parent=1 // pred_region
      %259 = vst [vmem:[#allocation8] sm:$0xff] %v247
      %260 = vst [vmem:[#allocation8 + $0x8] sm:$0xff] %v252
    $region37: #{tpu_custom_call.1} parent=1 // pred_fallthru
      _
    %p261 = scmp.gt.s32.totalorder 0, 0
    // Predicated region
    $region38: #{tpu_custom_call.1} parent=1 // pred_check
      %p262 = pneg %p261
    $region39: #{tpu_custom_call.1} parent=1 // pred_check_branch
      %264 = sbr.rel (%p262) target = $region41
    $region40: #{tpu_custom_call.1} parent=1 // pred_region
      %v265 = vld [vmem:[#allocation8] sm:$0xff]
      %v266 = vld [vmem:[#allocation8 + $0x8] sm:$0xff]
      %v267 = vadd.f32 %v265, %v247
      %v268 = vadd.f32 %v266, %v252
      %269 = vst [vmem:[#allocation8] sm:$0xff] %v267
      %270 = vst [vmem:[#allocation8 + $0x8] sm:$0xff] %v268
    $region41: #{tpu_custom_call.1} parent=1 // pred_fallthru
      _
    // Predicated region
    $region42: #{tpu_custom_call.1} parent=1 // pred_check
      %p271 = pneg %p255
    $region43: #{tpu_custom_call.1} parent=1 // pred_check_branch
      %273 = sbr.rel (%p271) target = $region45
    $region44: #{tpu_custom_call.1} parent=1 // pred_region
      %v274 = vld [vmem:[#allocation8] sm:$0xff]
      %v275 = vld [vmem:[#allocation8 + $0x8] sm:$0xff]
      %v276 = vld [vmem:[%s4] sm:$0x1]
      %v278 = vlaneseq
      %v279 = vshrl.u32 %v278, 7
      %v280 = vsub.s32 0, %v279
      %v281 = vrot.slane %v276, %v280
      %v283 = vadd.f32 %v274, %v281
      %v284 = vadd.f32 %v275, %v281
      %285 = vst [vmem:[#allocation8] sm:$0xff] %v283
      %286 = vst [vmem:[#allocation8 + $0x8] sm:$0xff] %v284
    $region45: #{tpu_custom_call.1} parent=1 // pred_fallthru
      _
    // Predicated region
    $region46: #{tpu_custom_call.1} parent=1 // pred_check
      _
    $region47: #{tpu_custom_call.1} parent=1 // pred_check_branch
      %288 = sbr.rel (0) target = $region49
    $region48: #{tpu_custom_call.1} parent=1 // pred_region
      %s290 = ssub.s32 256, 256
      %291 = vsyncadd [#allocation4], %s290
      %s292 = sshll.u32 [#allocation8], 4
      %s293 = int_to_ptr.vmem [resolvable:$true] %s292
      %298 = dma.vmem_to_hbm [thread:$0]  %s293, 256, %s5, [#allocation4], 128, 128, 8
    $region49: #{tpu_custom_call.1} parent=1 // pred_fallthru
      _
    // Predicated region
    $region50: #{tpu_custom_call.1} parent=1 // pred_check
      _
    $region51: #{tpu_custom_call.1} parent=1 // pred_check_branch
      %300 = sbr.rel (0) target = $region53
    $region52: #{tpu_custom_call.1} parent=1 // pred_region
      %301 = dma.done [#allocation4], 256
    $region53: #{tpu_custom_call.1} parent=1 // pred_fallthru
      _
    %302 = vsyncpa [#allocation3], 1
    %303 = vsyncpa [#allocation6], 1
    %304 = vsyncpa [#allocation4], 1

</llo_original>
